<compile_context>
chip_gen: v7x
topology: tpu7x:2x2x1
jax: 0.10.0
libtpu: 0.0.40
codegen_flags: <defaults>
</compile_context>

<pallas_src>
import jax
import jax.numpy as jnp
from jax.experimental import pallas as pl
from jax.experimental.pallas import tpu as pltpu

F_IN = 11    # wine feature count
F_PAD = 16   # padded K for layer 1 (sublane-friendly, tiny HBM cost vs 128)
D = 128      # hidden width (MXU- and lane-native)


def mlp_kernel(x_ref, w1_ref, w2_ref, w3_ref, w4_ref, b_ref, o_ref):
    # x_ref: (TB, 16)  w1: (16, 128)  w2/w3: (128, 128)  w4: (128, 1)
    # b_ref: (4, 128) f32  o_ref: (TB, 1)
    cdt = w1_ref.dtype  # matmul operand dtype (f32 or bf16); accumulate in f32

    # layer1 + ReLU (dropout is identity at inference)
    h = jnp.dot(x_ref[...], w1_ref[...], preferred_element_type=jnp.float32)
    h = jnp.maximum(h + b_ref[0:1, :], 0.0)

    # layer2 + ReLU
    h = jnp.dot(h.astype(cdt), w2_ref[...], preferred_element_type=jnp.float32)
    h = jnp.maximum(h + b_ref[1:2, :], 0.0)

    # layer3 + ReLU (cols 64..127 of w3/b3 are zero-padded -> those lanes stay 0)
    h = jnp.dot(h.astype(cdt), w3_ref[...], preferred_element_type=jnp.float32)
    h = jnp.maximum(h + b_ref[2:3, :], 0.0)

    # layer4 (no activation): (TB,128)@(128,1) -> (TB,1), lane-1 output block
    o_ref[...] = (jnp.dot(h.astype(cdt), w4_ref[...],
                          preferred_element_type=jnp.float32)
                  + b_ref[3:4, :1])


def _round_up(n, m):
    return ((n + m - 1) // m) * m


def _pad_to(a, shape):
    pads = [(0, s - d) for d, s in zip(a.shape, shape)]
    return jnp.pad(a, pads)


def pack_params(params, dtype=jnp.float32):
    """Zero-pad weights to MXU-friendly shapes; biases stay f32."""
    w1 = _pad_to(params["w1"].astype(dtype), (F_PAD, D))   # (11,128) -> (16,128)
    w2 = params["w2"].astype(dtype)                        # (128,128)
    w3 = _pad_to(params["w3"].astype(dtype), (D, D))       # (128,64) -> (128,128)
    w4 = _pad_to(params["w4"].astype(dtype), (D, 1))       # (64,1)   -> (128,1)
    b = jnp.stack([
        params["b1"].reshape(-1),
        params["b2"].reshape(-1),
        _pad_to(params["b3"].reshape(-1), (D,)),
        _pad_to(params["b4"].reshape(-1), (D,)),
    ]).astype(jnp.float32)                                 # (4,128)
    return w1, w2, w3, w4, b


def reference_forward(x, params):
    """Pure-JAX path (fused by XLA). Also used as the small-batch fast path."""
    x = x.astype(jnp.float32)
    h = jnp.maximum(x @ params["w1"] + params["b1"], 0.0)
    h = jnp.maximum(h @ params["w2"] + params["b2"], 0.0)
    h = jnp.maximum(h @ params["w3"] + params["b3"], 0.0)
    return h @ params["w4"] + params["b4"]


def simple_model_forward(x, params, *, tb=2048, use_bf16=False, force_pallas=False):
    """x: (B, 11) float. params: dict of (in,out) weights and (1,out) biases."""
    B, f_in = x.shape

    # Small-batch fast path: launch + pad overhead dominates for tiny B.
    if not force_pallas and B < 1024:
        return reference_forward(x, params)

    cdt = jnp.bfloat16 if use_bf16 else jnp.float32
    w1, w2, w3, w4, b = pack_params(params, cdt)

    # Batch tile: multiple of 8 sublanes, capped at `tb`, and capped at ~half the
    # (8-aligned) batch so the grid has >= 2 steps whenever possible (both v7x TCs).
    b8 = _round_up(B, 8)
    TB = min(tb, max(8, _round_up(max(b8 // 2, 8), 8)))
    B_pad = _round_up(B, TB)
    grid = (B_pad // TB,)

    # Only pad: batch rows up to B_pad, features 11 -> 16 (cheap (B_pad,16) slab).
    x_pad = jnp.zeros((B_pad, F_PAD), cdt).at[:B, :f_in].set(x.astype(cdt))

    # Advisory cost for XLA scheduling.
    flops = 2 * B_pad * (F_PAD * D + D * D + D * D + D * 1)
    bytes_accessed = (x_pad.size * x_pad.dtype.itemsize
                      + (w1.size + w2.size + w3.size + w4.size) * w1.dtype.itemsize
                      + b.size * 4
                      + B_pad * 4)

    out = pl.pallas_call(
        mlp_kernel,
        out_shape=jax.ShapeDtypeStruct((B_pad, 1), jnp.float32),
        grid=grid,
        in_specs=[
            pl.BlockSpec((TB, F_PAD), lambda i: (i, 0)),   # x: pipelined over batch
            pl.BlockSpec((F_PAD, D), lambda i: (0, 0)),    # w1: VMEM-resident
            pl.BlockSpec((D, D), lambda i: (0, 0)),        # w2
            pl.BlockSpec((D, D), lambda i: (0, 0)),        # w3 (col-padded)
            pl.BlockSpec((D, 1), lambda i: (0, 0)),        # w4 (row-padded, N=1)
            pl.BlockSpec((4, D), lambda i: (0, 0)),        # biases (f32)
        ],
        out_specs=pl.BlockSpec((TB, 1), lambda i: (i, 0)),  # narrow (TB,1) output
        compiler_params=pltpu.CompilerParams(
            dimension_semantics=("parallel",),              # shard batch across TCs (v7x)
            vmem_limit_bytes=32 * 1024 * 1024,              # tight, leaves v7x headroom
        ),
        cost_estimate=pl.CostEstimate(
            flops=flops, transcendentals=0, bytes_accessed=bytes_accessed),
    )(x_pad, w1, w2, w3, w4, b)

    return out[:B]


def init_params(key):
    """Deterministic init in the spirit of PyTorch nn.Linear defaults."""
    dims = [(11, 128), (128, 128), (128, 64), (64, 1)]
    params = {}
    for idx, (fin, fout) in enumerate(dims, start=1):
        key, kw, kb = jax.random.split(key, 3)
        bound = 1.0 / jnp.sqrt(jnp.float32(fin))
        params[f"w{idx}"] = jax.random.uniform(kw, (fin, fout), jnp.float32,
                                               minval=-bound, maxval=bound)
        params[f"b{idx}"] = jax.random.uniform(kb, (1, fout), jnp.float32,
                                               minval=-bound, maxval=bound)
    return params


if __name__ == "__main__":
    key = jax.random.PRNGKey(0)
    kx, kp = jax.random.split(key)
    params = init_params(kp)

    # Small deterministic batch; B=24 -> TB=16, grid=(2,) so the multi-step
    # pipelined path (and batch-row padding) is exercised.
    B = 24
    x = jax.random.normal(kx, (B, 11), dtype=jnp.float32)

    out = simple_model_forward(x, params, force_pallas=True)
    out = jax.block_until_ready(out)

    ref = reference_forward(x, params)
    assert out.shape == (B, 1)
    assert jnp.allclose(out, ref, atol=1e-4, rtol=1e-4)

    # TODO(synk): training-mode Dropout(0.2) would need in-kernel PRNG
    # (pltpu.prng_seed / pltpu.prng_random_bits); eval-mode is identity.
    print("KERNEL_OK")
</pallas_src>

<mosaic_0001>
module attributes {stable_mosaic.version = 11 : i64} {
  func.func @mlp_kernel(%arg0: i32, %arg1: memref<16x16xf32, #tpu.memory_space<vmem>>, %arg2: memref<16x128xf32, #tpu.memory_space<vmem>>, %arg3: memref<128x128xf32, #tpu.memory_space<vmem>>, %arg4: memref<128x128xf32, #tpu.memory_space<vmem>>, %arg5: memref<128x1xf32, #tpu.memory_space<vmem>>, %arg6: memref<4x128xf32, #tpu.memory_space<vmem>>, %arg7: memref<16x1xf32, #tpu.memory_space<vmem>>) attributes {dimension_semantics = [#tpu.dimension_semantics<parallel>], iteration_bounds = array<i64: 2>, scalar_prefetch = 0 : i64, scratch_operands = 0 : i64, tpu.core_type = #tpu.core_type<tc>, window_params = [{transform_indices = @transform_0, window_bounds = array<i64: 16, 16>}, {pipeline_mode = #tpu.pipeline_mode<synchronous>, transform_indices = @transform_1, window_bounds = array<i64: 16, 128>}, {pipeline_mode = #tpu.pipeline_mode<synchronous>, transform_indices = @transform_2, window_bounds = array<i64: 128, 128>}, {pipeline_mode = #tpu.pipeline_mode<synchronous>, transform_indices = @transform_3, window_bounds = array<i64: 128, 128>}, {pipeline_mode = #tpu.pipeline_mode<synchronous>, transform_indices = @transform_4, window_bounds = array<i64: 128, 1>}, {pipeline_mode = #tpu.pipeline_mode<synchronous>, transform_indices = @transform_5, window_bounds = array<i64: 4, 128>}, {transform_indices = @transform_6, window_bounds = array<i64: 16, 1>}]} {
    %c0 = arith.constant 0 : index
    %c0_0 = arith.constant 0 : index
    %0 = vector.load %arg1[%c0, %c0_0] : memref<16x16xf32, #tpu.memory_space<vmem>>, vector<16x16xf32>
    %c0_1 = arith.constant 0 : index
    %c0_2 = arith.constant 0 : index
    %1 = vector.load %arg2[%c0_1, %c0_2] : memref<16x128xf32, #tpu.memory_space<vmem>>, vector<16x128xf32>
    %cst = arith.constant dense<0.000000e+00> : vector<16x128xf32>
    %2 = tpu.matmul %0, %1, %cst {dimension_numbers = #tpu.dot_dimension_numbers<[1], [0], [0], [1], [0, 0, 1, 1], [], []>} : vector<16x16xf32>, vector<16x128xf32>, vector<16x128xf32> -> vector<16x128xf32>
    %c0_3 = arith.constant 0 : index
    %c0_4 = arith.constant 0 : index
    %3 = vector.load %arg6[%c0_3, %c0_4] : memref<4x128xf32, #tpu.memory_space<vmem>>, vector<1x128xf32>
    %4 = vector.broadcast %3 : vector<1x128xf32> to vector<16x128xf32>
    %5 = arith.addf %2, %4 : vector<16x128xf32>
    %cst_5 = arith.constant 0.000000e+00 : f32
    %6 = vector.broadcast %cst_5 : f32 to vector<16x128xf32>
    %7 = arith.maximumf %5, %6 : vector<16x128xf32>
    %c0_6 = arith.constant 0 : index
    %c0_7 = arith.constant 0 : index
    %8 = vector.load %arg3[%c0_6, %c0_7] : memref<128x128xf32, #tpu.memory_space<vmem>>, vector<128x128xf32>
    %cst_8 = arith.constant dense<0.000000e+00> : vector<16x128xf32>
    %9 = tpu.matmul %7, %8, %cst_8 {dimension_numbers = #tpu.dot_dimension_numbers<[1], [0], [0], [1], [0, 0, 1, 1], [], []>} : vector<16x128xf32>, vector<128x128xf32>, vector<16x128xf32> -> vector<16x128xf32>
    %c1 = arith.constant 1 : index
    %c0_9 = arith.constant 0 : index
    %10 = vector.load %arg6[%c1, %c0_9] : memref<4x128xf32, #tpu.memory_space<vmem>>, vector<1x128xf32>
    %11 = vector.broadcast %10 : vector<1x128xf32> to vector<16x128xf32>
    %12 = arith.addf %9, %11 : vector<16x128xf32>
    %cst_10 = arith.constant 0.000000e+00 : f32
    %13 = vector.broadcast %cst_10 : f32 to vector<16x128xf32>
    %14 = arith.maximumf %12, %13 : vector<16x128xf32>
    %c0_11 = arith.constant 0 : index
    %c0_12 = arith.constant 0 : index
    %15 = vector.load %arg4[%c0_11, %c0_12] : memref<128x128xf32, #tpu.memory_space<vmem>>, vector<128x128xf32>
    %cst_13 = arith.constant dense<0.000000e+00> : vector<16x128xf32>
    %16 = tpu.matmul %14, %15, %cst_13 {dimension_numbers = #tpu.dot_dimension_numbers<[1], [0], [0], [1], [0, 0, 1, 1], [], []>} : vector<16x128xf32>, vector<128x128xf32>, vector<16x128xf32> -> vector<16x128xf32>
    %c2 = arith.constant 2 : index
    %c0_14 = arith.constant 0 : index
    %17 = vector.load %arg6[%c2, %c0_14] : memref<4x128xf32, #tpu.memory_space<vmem>>, vector<1x128xf32>
    %18 = vector.broadcast %17 : vector<1x128xf32> to vector<16x128xf32>
    %19 = arith.addf %16, %18 : vector<16x128xf32>
    %cst_15 = arith.constant 0.000000e+00 : f32
    %20 = vector.broadcast %cst_15 : f32 to vector<16x128xf32>
    %21 = arith.maximumf %19, %20 : vector<16x128xf32>
    %c0_16 = arith.constant 0 : index
    %c0_17 = arith.constant 0 : index
    %22 = vector.load %arg5[%c0_16, %c0_17] : memref<128x1xf32, #tpu.memory_space<vmem>>, vector<128x1xf32>
    %cst_18 = arith.constant dense<0.000000e+00> : vector<16x1xf32>
    %23 = tpu.matmul %21, %22, %cst_18 {dimension_numbers = #tpu.dot_dimension_numbers<[1], [0], [0], [1], [0, 0, 1, 1], [], []>} : vector<16x128xf32>, vector<128x1xf32>, vector<16x1xf32> -> vector<16x1xf32>
    %c3 = arith.constant 3 : index
    %c0_19 = arith.constant 0 : index
    %24 = vector.load %arg6[%c3, %c0_19] : memref<4x128xf32, #tpu.memory_space<vmem>>, vector<1x1xf32>
    %25 = vector.broadcast %24 : vector<1x1xf32> to vector<16x1xf32>
    %26 = arith.addf %23, %25 : vector<16x1xf32>
    %c0_20 = arith.constant 0 : index
    %c0_21 = arith.constant 0 : index
    %27 = vector.load %arg7[%c0_20, %c0_21] : memref<16x1xf32, #tpu.memory_space<vmem>>, vector<16x1xf32>
    tpu.vector_store %arg7[%c0_20, %c0_21], %26 {strides = array<i32>} : memref<16x1xf32, #tpu.memory_space<vmem>>, vector<16x1xf32>,
    return
  }
  func.func @transform_0(%arg0: i32) -> (i32, i32) {
    %c0_i32 = arith.constant 0 : i32
    %c0_i32_0 = arith.constant 0 : i32
    return %arg0, %c0_i32 : i32, i32
  }
  func.func @transform_1(%arg0: i32) -> (i32, i32) {
    %c0_i32 = arith.constant 0 : i32
    %c0_i32_0 = arith.constant 0 : i32
    %c0_i32_1 = arith.constant 0 : i32
    return %c0_i32, %c0_i32_0 : i32, i32
  }
  func.func @transform_2(%arg0: i32) -> (i32, i32) {
    %c0_i32 = arith.constant 0 : i32
    %c0_i32_0 = arith.constant 0 : i32
    %c0_i32_1 = arith.constant 0 : i32
    return %c0_i32, %c0_i32_0 : i32, i32
  }
  func.func @transform_3(%arg0: i32) -> (i32, i32) {
    %c0_i32 = arith.constant 0 : i32
    %c0_i32_0 = arith.constant 0 : i32
    %c0_i32_1 = arith.constant 0 : i32
    return %c0_i32, %c0_i32_0 : i32, i32
  }
  func.func @transform_4(%arg0: i32) -> (i32, i32) {
    %c0_i32 = arith.constant 0 : i32
    %c0_i32_0 = arith.constant 0 : i32
    %c0_i32_1 = arith.constant 0 : i32
    return %c0_i32, %c0_i32_0 : i32, i32
  }
  func.func @transform_5(%arg0: i32) -> (i32, i32) {
    %c0_i32 = arith.constant 0 : i32
    %c0_i32_0 = arith.constant 0 : i32
    %c0_i32_1 = arith.constant 0 : i32
    return %c0_i32, %c0_i32_0 : i32, i32
  }
  func.func @transform_6(%arg0: i32) -> (i32, i32) {
    %c0_i32 = arith.constant 0 : i32
    %c0_i32_0 = arith.constant 0 : i32
    return %arg0, %c0_i32 : i32, i32
  }
}

</mosaic_0001>

<llo_original>
// kernel: tpu_custom_call.1
$region0: #{tpu_custom_call.1}
  #allocation0 [shape = 'u32[]', space=smem, size = 0x4, offset = 0x4, fixed_abs, tag = 'smem constant byte address 0x4 - core index']
  #allocation1 [shape = 'u32[144,128]{1,0:T(1,128)}', space=vmem, size = 0x12000, scoped, tag = 'internal scratch']
  %s0 = inlined_call_operand.vmem [shape: f32[32,16], index: 0, kind: input, shape index: {}]
  %s1 = inlined_call_operand.vmem [shape: f32[16,128], index: 1, kind: input, shape index: {}]
  %s2 = inlined_call_operand.vmem [shape: f32[128,128], index: 2, kind: input, shape index: {}]
  %s3 = inlined_call_operand.hbm [shape: f32[128,128], index: 3, kind: input, shape index: {}]
  %s4 = inlined_call_operand.vmem [shape: f32[128,1], index: 4, kind: input, shape index: {}]
  %s5 = inlined_call_operand.vmem [shape: f32[4,128], index: 5, kind: input, shape index: {}]
  %s6 = inlined_call_operand.vmem [shape: f32[32,1], index: 6, kind: output, shape index: {}]
  %s7 = sld [smem:[#allocation0]]
  $region61: #{tpu_custom_call.1} parent=0
    _
  %s9 = ssub.s32 1, %s7
  %s10 = scalar_select 0, %s9, %s7
  $region1: #{tpu_custom_call.1} parent=0
    #allocation2 [shape = 'u8[65536]{0}', space=vmem, size = 0x10000, scoped, tag = 'input window, operand 3, single buffered']
    #allocation3 [shape = 's32[2]{0}', space=sflag, size = 0x8, scoped, tag = 'scoped memory for tpu_custom_call.1']
    %11 = vsyncpa [#allocation3], 0
    loop: start=0, step=1, limit=4
    $region2: #{tpu_custom_call.1} parent=1 // loop_pre_header
      _
    $region3: #{tpu_custom_call.1} parent=1 // loop_header
      %s13 = sphi 0, %s17
      %p14 = scmp.ge.s32.totalorder %s13, 4
      %s23 = sphi 0, %s25
      %s26 = sphi 0, %s23
      %s27 = sphi 0, %s26
      %s43 = sphi 0, %s27
      %s47 = sphi 0, %s47
      %s49 = sphi 0, %s47
      %s50 = sphi 0, %s49
      %s64 = sphi 0, %s50
      %s68 = sphi 0, %s68
      %s70 = sphi 0, %s68
      %s71 = sphi 0, %s70
      %s85 = sphi 0, %s71
      %s89 = sphi 0, %s89
      %s91 = sphi 0, %s89
      %s92 = sphi 0, %s91
      %s106 = sphi 0, %s92
      %s110 = sphi 0, %s110
      %s112 = sphi 0, %s110
      %s113 = sphi 0, %s112
      %s127 = sphi 0, %s113
      %s131 = sphi 0, %s131
      %s133 = sphi 0, %s131
      %s134 = sphi 0, %s133
      %s148 = sphi 0, %s134
      %s154 = sphi 0, %s156
      %s157 = sphi 0, %s154
      %s158 = sphi 0, %s157
      %s174 = sphi 0, %s158
    $region4: #{tpu_custom_call.1} parent=1 // loop_header_branch
      %16 = sbr.rel (%p14) target = $region8
    $region5: #{tpu_custom_call.1} parent=1 // loop_body
      %s18 = ssub.s32 %s13, 1
      %s19 = ssub.s32 %s13, 2
      %s20 = sadd.s32 %s13, 1
      %s21 = ssub.s32 %s13, %s20
      %p22 = scmp.eq.s32.totalorder %s21, 0
      %s24 = sadd.s32 %s23, 1
      %s25 = scalar_select %p22, %s23, %s24
      %p28 = pneg %p22
      %p29 = scmp.eq.s32.totalorder %s13, 1
      %p30 = por %p28, %p29
      %p31 = scmp.ne.s32.totalorder %s23, %s26
      %p32 = scmp.eq.s32.totalorder %s13, 0
      %p33 = por %p31, %p32
      %p34 = scmp.ne.s32.totalorder %s23, %s26
      %p35 = scmp.eq.s32.totalorder %s18, 1
      %p36 = por %p34, %p35
      %p37 = scmp.ne.s32.totalorder %s26, %s27
      %p38 = scmp.eq.s32.totalorder %s18, 0
      %p39 = por %p37, %p38
      %p40 = scmp.ne.s32.totalorder %s26, %s27
      %p41 = scmp.eq.s32.totalorder %s19, 1
      %p42 = por %p40, %p41
      %p44 = scmp.ne.s32.totalorder %s27, %s43
      %p45 = scmp.eq.s32.totalorder %s19, 0
      %p46 = por %p44, %p45
      %s48 = sadd.s32 %s47, 1
      %p51 = scmp.eq.s32.totalorder %s13, 1
      %p52 = scmp.ne.s32.totalorder %s47, %s49
      %p53 = scmp.eq.s32.totalorder %s13, 0
      %p54 = por %p52, %p53
      %p55 = scmp.ne.s32.totalorder %s47, %s49
      %p56 = scmp.eq.s32.totalorder %s18, 1
      %p57 = por %p55, %p56
      %p58 = scmp.ne.s32.totalorder %s49, %s50
      %p59 = scmp.eq.s32.totalorder %s18, 0
      %p60 = por %p58, %p59
      %p61 = scmp.ne.s32.totalorder %s49, %s50
      %p62 = scmp.eq.s32.totalorder %s19, 1
      %p63 = por %p61, %p62
      %p65 = scmp.ne.s32.totalorder %s50, %s64
      %p66 = scmp.eq.s32.totalorder %s19, 0
      %p67 = por %p65, %p66
      %s69 = sadd.s32 %s68, 1
      %p72 = scmp.eq.s32.totalorder %s13, 1
      %p73 = scmp.ne.s32.totalorder %s68, %s70
      %p74 = scmp.eq.s32.totalorder %s13, 0
      %p75 = por %p73, %p74
      %p76 = scmp.ne.s32.totalorder %s68, %s70
      %p77 = scmp.eq.s32.totalorder %s18, 1
      %p78 = por %p76, %p77
      %p79 = scmp.ne.s32.totalorder %s70, %s71
      %p80 = scmp.eq.s32.totalorder %s18, 0
      %p81 = por %p79, %p80
      %p82 = scmp.ne.s32.totalorder %s70, %s71
      %p83 = scmp.eq.s32.totalorder %s19, 1
      %p84 = por %p82, %p83
      %p86 = scmp.ne.s32.totalorder %s71, %s85
      %p87 = scmp.eq.s32.totalorder %s19, 0
      %p88 = por %p86, %p87
      %s90 = sadd.s32 %s89, 1
      %p93 = scmp.eq.s32.totalorder %s13, 1
      %p94 = scmp.ne.s32.totalorder %s89, %s91
      %p95 = scmp.eq.s32.totalorder %s13, 0
      %p96 = por %p94, %p95
      %p97 = scmp.ne.s32.totalorder %s89, %s91
      %p98 = scmp.eq.s32.totalorder %s18, 1
      %p99 = por %p97, %p98
      %p100 = scmp.ne.s32.totalorder %s91, %s92
      %p101 = scmp.eq.s32.totalorder %s18, 0
      %p102 = por %p100, %p101
      %p103 = scmp.ne.s32.totalorder %s91, %s92
      %p104 = scmp.eq.s32.totalorder %s19, 1
      %p105 = por %p103, %p104
      %p107 = scmp.ne.s32.totalorder %s92, %s106
      %p108 = scmp.eq.s32.totalorder %s19, 0
      %p109 = por %p107, %p108
      %s111 = sadd.s32 %s110, 1
      %p114 = scmp.eq.s32.totalorder %s13, 1
      %p115 = scmp.ne.s32.totalorder %s110, %s112
      %p116 = scmp.eq.s32.totalorder %s13, 0
      %p117 = por %p115, %p116
      %p118 = scmp.ne.s32.totalorder %s110, %s112
      %p119 = scmp.eq.s32.totalorder %s18, 1
      %p120 = por %p118, %p119
      %p121 = scmp.ne.s32.totalorder %s112, %s113
      %p122 = scmp.eq.s32.totalorder %s18, 0
      %p123 = por %p121, %p122
      %p124 = scmp.ne.s32.totalorder %s112, %s113
      %p125 = scmp.eq.s32.totalorder %s19, 1
      %p126 = por %p124, %p125
      %p128 = scmp.ne.s32.totalorder %s113, %s127
      %p129 = scmp.eq.s32.totalorder %s19, 0
      %p130 = por %p128, %p129
      %s132 = sadd.s32 %s131, 1
      %p135 = scmp.eq.s32.totalorder %s13, 1
      %p136 = scmp.ne.s32.totalorder %s131, %s133
      %p137 = scmp.eq.s32.totalorder %s13, 0
      %p138 = por %p136, %p137
      %p139 = scmp.ne.s32.totalorder %s131, %s133
      %p140 = scmp.eq.s32.totalorder %s18, 1
      %p141 = por %p139, %p140
      %p142 = scmp.ne.s32.totalorder %s133, %s134
      %p143 = scmp.eq.s32.totalorder %s18, 0
      %p144 = por %p142, %p143
      %p145 = scmp.ne.s32.totalorder %s133, %s134
      %p146 = scmp.eq.s32.totalorder %s19, 1
      %p147 = por %p145, %p146
      %p149 = scmp.ne.s32.totalorder %s134, %s148
      %p150 = scmp.eq.s32.totalorder %s19, 0
      %p151 = por %p149, %p150
      %s152 = ssub.s32 %s13, %s20
      %p153 = scmp.eq.s32.totalorder %s152, 0
      %s155 = sadd.s32 %s154, 1
      %s156 = scalar_select %p153, %s154, %s155
      %p159 = pneg %p153
      %p160 = scmp.eq.s32.totalorder %s13, 1
      %p161 = por %p159, %p160
      %p162 = scmp.ne.s32.totalorder %s154, %s157
      %p163 = scmp.eq.s32.totalorder %s13, 0
      %p164 = por %p162, %p163
      %p165 = scmp.ne.s32.totalorder %s154, %s157
      %p166 = scmp.eq.s32.totalorder %s18, 1
      %p167 = por %p165, %p166
      %p168 = scmp.ne.s32.totalorder %s157, %s158
      %p169 = scmp.eq.s32.totalorder %s18, 0
      %p170 = por %p168, %p169
      %p171 = scmp.ne.s32.totalorder %s157, %s158
      %p172 = scmp.eq.s32.totalorder %s19, 1
      %p173 = por %p171, %p172
      %p175 = scmp.ne.s32.totalorder %s158, %s174
      %p176 = scmp.eq.s32.totalorder %s19, 0
      %p177 = por %p175, %p176
      %p178 = scmp.le.s32.totalorder 1, %s13
      %p179 = scmp.lt.s32.totalorder %s13, 3
      %p180 = pnand %p178, %p179
      %p181 = pneg %p180
      // Predicated region
      $region9: #{tpu_custom_call.1} parent=5 // pred_check
        _
      $region10: #{tpu_custom_call.1} parent=5 // pred_check_branch
        %183 = sbr.rel (%p180) target = $region12
      $region11: #{tpu_custom_call.1} parent=5 // pred_region
        %s184 = ssub.s32 %s13, 1
        // Predicated region
        $region13: #{tpu_custom_call.1} parent=11 // pred_check
          %p185 = pneg %p60
        $region14: #{tpu_custom_call.1} parent=11 // pred_check_branch
          %187 = sbr.rel (%p185) target = $region16
        $region15: #{tpu_custom_call.1} parent=11 // pred_region
          _
        $region16: #{tpu_custom_call.1} parent=11 // pred_fallthru
          _
        // Predicated region
        $region17: #{tpu_custom_call.1} parent=11 // pred_check
          %p188 = pneg %p81
        $region18: #{tpu_custom_call.1} parent=11 // pred_check_branch
          %190 = sbr.rel (%p188) target = $region20
        $region19: #{tpu_custom_call.1} parent=11 // pred_region
          _
        $region20: #{tpu_custom_call.1} parent=11 // pred_fallthru
          _
        // Predicated region
        $region21: #{tpu_custom_call.1} parent=11 // pred_check
          %p191 = pneg %p102
        $region22: #{tpu_custom_call.1} parent=11 // pred_check_branch
          %193 = sbr.rel (%p191) target = $region24
        $region23: #{tpu_custom_call.1} parent=11 // pred_region
          %s195 = ssub.s32 2048, 2048
          %196 = vsyncadd [#allocation3], %s195
          %s197 = sshll.u32 [#allocation2], 4
          %s198 = int_to_ptr.vmem [resolvable:$true] %s197
          %203 = dma.hbm_to_vmem [thread:$0]  %s3, 2048, %s198, [#allocation3], 128, 128, 8
        $region24: #{tpu_custom_call.1} parent=11 // pred_fallthru
          _
        // Predicated region
        $region25: #{tpu_custom_call.1} parent=11 // pred_check
          %p204 = pneg %p123
        $region26: #{tpu_custom_call.1} parent=11 // pred_check_branch
          %206 = sbr.rel (%p204) target = $region28
        $region27: #{tpu_custom_call.1} parent=11 // pred_region
          _
        $region28: #{tpu_custom_call.1} parent=11 // pred_fallthru
          _
        // Predicated region
        $region29: #{tpu_custom_call.1} parent=11 // pred_check
          %p207 = pneg %p144
        $region30: #{tpu_custom_call.1} parent=11 // pred_check_branch
          %209 = sbr.rel (%p207) target = $region32
        $region31: #{tpu_custom_call.1} parent=11 // pred_region
          _
        $region32: #{tpu_custom_call.1} parent=11 // pred_fallthru
          _
      $region12: #{tpu_custom_call.1} parent=5 // pred_fallthru
        _
      %p210 = scmp.lt.s32.totalorder %s13, 2
      // Predicated region
      $region33: #{tpu_custom_call.1} parent=5 // pred_check
        %p211 = pneg %p210
      $region34: #{tpu_custom_call.1} parent=5 // pred_check_branch
        %213 = sbr.rel (%p211) target = $region36
      $region35: #{tpu_custom_call.1} parent=5 // pred_region
        // Predicated region
        $region37: #{tpu_custom_call.1} parent=35 // pred_check
          %p214 = pneg %p33
        $region38: #{tpu_custom_call.1} parent=35 // pred_check_branch
          %216 = sbr.rel (%p214) target = $region40
        $region39: #{tpu_custom_call.1} parent=35 // pred_region
          %s217 = smul.u32 2, %s13
          %p218 = scmp.lt.s32.totalorder %s217, 3
          %s219 = scalar_select %p218, %s217, 3
          %s220 = smul.addr %s219, 8
          %s221 = scalar_lea.vmem %s0, %s220
          %s222 = smul.u32 2, %s13
        $region40: #{tpu_custom_call.1} parent=35 // pred_fallthru
          _
      $region36: #{tpu_custom_call.1} parent=5 // pred_fallthru
        _
      %p223 = scmp.le.s32.totalorder 1, %s13
      %p224 = scmp.lt.s32.totalorder %s13, 3
      %p225 = pnand %p223, %p224
      %p226 = pneg %p225
      // Predicated region
      $region41: #{tpu_custom_call.1} parent=5 // pred_check
        _
      $region42: #{tpu_custom_call.1} parent=5 // pred_check_branch
        %228 = sbr.rel (%p225) target = $region44
      $region43: #{tpu_custom_call.1} parent=5 // pred_region
        %s229 = ssub.s32 %s13, 1
        // Predicated region
        $region45: #{tpu_custom_call.1} parent=43 // pred_check
          %p230 = pneg %p102
        $region46: #{tpu_custom_call.1} parent=43 // pred_check_branch
          %232 = sbr.rel (%p230) target = $region48
        $region47: #{tpu_custom_call.1} parent=43 // pred_region
          %233 = dma.done [#allocation3], 2048
        $region48: #{tpu_custom_call.1} parent=43 // pred_fallthru
          _
        %s234 = smul.u32 2, %s18
        %p235 = scmp.lt.s32.totalorder %s234, 3
        %s236 = scalar_select %p235, %s234, 3
        %s237 = smul.addr %s236, 8
        %s238 = scalar_lea.vmem %s0, %s237
        %p239 = pneg %p39
        %p240 = pneg %p36
        %p241 = pneg %p60
        %p242 = pneg %p57
        %p243 = pneg %p81
        %p244 = pneg %p78
        %p245 = pneg %p102
        %p246 = pneg %p99
        %p247 = pneg %p123
        %p248 = pneg %p120
        %p249 = pneg %p144
        %p250 = pneg %p141
        %p251 = pneg %p170
        %p252 = pneg %p167
        %s253 = smul.u32 2, %s18
        %p254 = scmp.lt.s32.totalorder %s253, 3
        %s255 = scalar_select %p254, %s253, 3
        %s256 = smul.addr %s255, 8
        %s257 = scalar_lea.vmem %s6, %s256
        %s258 = smul.u32 2, %s18
        %p259 = scmp.lt.s32.totalorder %s258, 3
        %s260 = scalar_select %p259, %s258, 3
        %s261 = smul.addr %s260, 8
        %s262 = scalar_lea.vmem %s0, %s261
        %s263 = smul.u32 2, %s18
        %s264 = smul.u32 2, %s18
        %p265 = scmp.lt.s32.totalorder %s264, 3
        %s266 = scalar_select %p265, %s264, 3
        %s267 = smul.addr %s266, 8
        %s268 = scalar_lea.vmem %s6, %s267
        %s269 = smul.u32 2, %s18
        %v270 = vld [vmem:[%s262] sm:$0xff]
        %v271 = vld [vmem:[%s262 + $0x8] sm:$0xff]
        %v272 = vld [vmem:[%s1] sm:$0xff]
        %v273 = vld [vmem:[%s1 + $0x8] sm:$0xff]
        %v274 = vld [vmem:[%s5] sm:$0x1]
        %v275 = vlaneseq
        %v276 = vshrl.u32 %v275, 7
        %v277 = vsub.s32 0, %v276
        %v278 = vrot.slane %v274, %v277
        %vm279 = vcmask 130048
        %v281 = vsel %vm279, %v270, 0
        %v284 = vsel %vm279, %v271, 0
        %286 = vmatprep.subr.mxu0 0.0
        %287 = vmatpush1.msra.mxu0 %v272
        %288 = vmatprep.subr.mxu0 0.0
        %289 = vmatpush1.msra.mxu0 %v273
        %290 = vmatprep.subr.mxu0 0.0
        %291 = vmatpush1.msra.mxu0 0.0
        %292 = vmatprep.subr.mxu0 0.0
        %293 = vmatpush1.msra.mxu0 0.0
        %294 = vmatprep.subr.mxu0 0.0
        %295 = vmatpush1.msra.mxu0 0.0
        %296 = vmatprep.subr.mxu0 0.0
        %297 = vmatpush1.msra.mxu0 0.0
        %298 = vmatprep.subr.mxu0 0.0
        %299 = vmatpush1.msra.mxu0 0.0
        %300 = vmatprep.subr.mxu0 0.0
        %301 = vmatpush1.msra.mxu0 0.0
        %302 = vmatprep.subr.mxu0 0.0
        %303 = vmatpush1.msra.mxu0 0.0
        %304 = vmatprep.subr.mxu0 0.0
        %305 = vmatpush1.msra.mxu0 0.0
        %306 = vmatprep.subr.mxu0 0.0
        %307 = vmatpush1.msra.mxu0 0.0
        %308 = vmatprep.subr.mxu0 0.0
        %309 = vmatpush1.msra.mxu0 0.0
        %310 = vmatprep.subr.mxu0 0.0
        %311 = vmatpush1.msra.mxu0 0.0
        %312 = vmatprep.subr.mxu0 0.0
        %313 = vmatpush1.msra.mxu0 0.0
        %314 = vmatprep.subr.mxu0 0.0
        %315 = vmatpush1.msra.mxu0 0.0
        %316 = vmatprep.subr.mxu0 0.0
        %317 = vmatpush1.msra.mxu0 0.0
        %318 = vmatprep.subr.mxu0 0.0
        %319 = vmatpush1.msra.mxu0 0.0
        %320 = vmatprep.subr.mxu0 0.0
        %321 = vmatpush1.msra.mxu0 0.0
        %322 = vmatprep.subr.mxu0 0.0
        %323 = vmatpush1.msra.mxu0 0.0
        %324 = vmatprep.subr.mxu0 0.0
        %325 = vmatpush1.msra.mxu0 0.0
        %326 = vmatprep.subr.mxu0 0.0
        %327 = vmatpush1.msra.mxu0 0.0
        %328 = vmatprep.subr.mxu0 0.0
        %329 = vmatpush1.msra.mxu0 0.0
        %330 = vmatprep.subr.mxu0 0.0
        %331 = vmatpush1.msra.mxu0 0.0
        %332 = vmatprep.subr.mxu0 0.0
        %333 = vmatpush1.msra.mxu0 0.0
        %334 = vmatprep.subr.mxu0 0.0
        %335 = vmatpush1.msra.mxu0 0.0
        %336 = vmatprep.subr.mxu0 0.0
        %337 = vmatpush1.msra.mxu0 0.0
        %338 = vmatprep.subr.mxu0 0.0
        %339 = vmatpush1.msra.mxu0 0.0
        %340 = vmatprep.subr.mxu0 0.0
        %341 = vmatpush1.msra.mxu0 0.0
        %342 = vmatprep.subr.mxu0 0.0
        %343 = vmatpush1.msra.mxu0 0.0
        %344 = vmatprep.subr.mxu0 0.0
        %345 = vmatpush1.msra.mxu0 0.0
        %346 = vmatprep.subr.mxu0 0.0
        %347 = vmatpush1.msra.mxu0 0.0
        %348 = vmatprep.subr.mxu0 0.0
        %349 = vmatpush1.msra.mxu0 0.0
        %350 = vmatprep.mubr.f32.mxu0 0.0
        %351 = vmatmul.mubr.f32.gmra.mrb[0].mxu0 %v281
        %v352 = vpop.f32.mrb[0].mxu0
        %v353 = vadd.f32 %v278, %v352
        %v354 = vpop.f32.mrb[0].mxu0
        %355 = vmatprep.mubr.f32.mxu0 0.0
        %356 = vmatmul.mubr.f32.gmra.mrb[0].mxu0 %v284
        %v357 = vpop.f32.mrb[0].mxu0
        %v358 = vadd.f32 %v278, %v357
        %v359 = vpop.f32.mrb[0].mxu0
        %360 = vdwg.mxu0
        %v361 = vmax.f32 %v353, 0.0
        %v362 = vmax.f32 %v358, 0.0
        %v363 = vld [vmem:[%s2] sm:$0xff]
        %v364 = vld [vmem:[%s2 + $0x8] sm:$0xff]
        %v365 = vld [vmem:[%s2 + $0x10] sm:$0xff]
        %v366 = vld [vmem:[%s2 + $0x18] sm:$0xff]
        %v367 = vld [vmem:[%s2 + $0x20] sm:$0xff]
        %v368 = vld [vmem:[%s2 + $0x28] sm:$0xff]
        %v369 = vld [vmem:[%s2 + $0x30] sm:$0xff]
        %v370 = vld [vmem:[%s2 + $0x38] sm:$0xff]
        %v371 = vld [vmem:[%s2 + $0x40] sm:$0xff]
        %v372 = vld [vmem:[%s2 + $0x48] sm:$0xff]
        %v373 = vld [vmem:[%s2 + $0x50] sm:$0xff]
        %v374 = vld [vmem:[%s2 + $0x58] sm:$0xff]
        %v375 = vld [vmem:[%s2 + $0x60] sm:$0xff]
        %v376 = vld [vmem:[%s2 + $0x68] sm:$0xff]
        %v377 = vld [vmem:[%s2 + $0x70] sm:$0xff]
        %v378 = vld [vmem:[%s2 + $0x78] sm:$0xff]
        %v379 = vld [vmem:[%s5 + $0x1] sm:$0x1]
        %v380 = vlaneseq
        %v381 = vshrl.u32 %v380, 7
        %v382 = vsub.s32 0, %v381
        %v383 = vrot.slane %v379, %v382
        %384 = vmatprep.subr.mxu0 0.0
        %385 = vmatpush1.msra.mxu0 %v363
        %386 = vmatprep.subr.mxu0 0.0
        %387 = vmatpush1.msra.mxu0 %v364
        %388 = vmatprep.subr.mxu0 0.0
        %389 = vmatpush1.msra.mxu0 %v365
        %390 = vmatprep.subr.mxu0 0.0
        %391 = vmatpush1.msra.mxu0 %v366
        %392 = vmatprep.subr.mxu0 0.0
        %393 = vmatpush1.msra.mxu0 %v367
        %394 = vmatprep.subr.mxu0 0.0
        %395 = vmatpush1.msra.mxu0 %v368
        %396 = vmatprep.subr.mxu0 0.0
        %397 = vmatpush1.msra.mxu0 %v369
        %398 = vmatprep.subr.mxu0 0.0
        %399 = vmatpush1.msra.mxu0 %v370
        %400 = vmatprep.subr.mxu0 0.0
        %401 = vmatpush1.msra.mxu0 %v371
        %402 = vmatprep.subr.mxu0 0.0
        %403 = vmatpush1.msra.mxu0 %v372
        %404 = vmatprep.subr.mxu0 0.0
        %405 = vmatpush1.msra.mxu0 %v373
        %406 = vmatprep.subr.mxu0 0.0
        %407 = vmatpush1.msra.mxu0 %v374
        %408 = vmatprep.subr.mxu0 0.0
        %409 = vmatpush1.msra.mxu0 %v375
        %410 = vmatprep.subr.mxu0 0.0
        %411 = vmatpush1.msra.mxu0 %v376
        %412 = vmatprep.subr.mxu0 0.0
        %413 = vmatpush1.msra.mxu0 %v377
        %414 = vmatprep.subr.mxu0 0.0
        %415 = vmatpush1.msra.mxu0 %v378
        %416 = vmatprep.subr.mxu0 0.0
        %417 = vmatpush1.msra.mxu0 0.0
        %418 = vmatprep.subr.mxu0 0.0
        %419 = vmatpush1.msra.mxu0 0.0
        %420 = vmatprep.subr.mxu0 0.0
        %421 = vmatpush1.msra.mxu0 0.0
        %422 = vmatprep.subr.mxu0 0.0
        %423 = vmatpush1.msra.mxu0 0.0
        %424 = vmatprep.subr.mxu0 0.0
        %425 = vmatpush1.msra.mxu0 0.0
        %426 = vmatprep.subr.mxu0 0.0
        %427 = vmatpush1.msra.mxu0 0.0
        %428 = vmatprep.subr.mxu0 0.0
        %429 = vmatpush1.msra.mxu0 0.0
        %430 = vmatprep.subr.mxu0 0.0
        %431 = vmatpush1.msra.mxu0 0.0
        %432 = vmatprep.subr.mxu0 0.0
        %433 = vmatpush1.msra.mxu0 0.0
        %434 = vmatprep.subr.mxu0 0.0
        %435 = vmatpush1.msra.mxu0 0.0
        %436 = vmatprep.subr.mxu0 0.0
        %437 = vmatpush1.msra.mxu0 0.0
        %438 = vmatprep.subr.mxu0 0.0
        %439 = vmatpush1.msra.mxu0 0.0
        %440 = vmatprep.subr.mxu0 0.0
        %441 = vmatpush1.msra.mxu0 0.0
        %442 = vmatprep.subr.mxu0 0.0
        %443 = vmatpush1.msra.mxu0 0.0
        %444 = vmatprep.subr.mxu0 0.0
        %445 = vmatpush1.msra.mxu0 0.0
        %446 = vmatprep.subr.mxu0 0.0
        %447 = vmatpush1.msra.mxu0 0.0
        %448 = vmatprep.mubr.f32.mxu0 0.0
        %449 = vmatmul.mubr.f32.gmra.mrb[0].mxu0 %v361
        %v450 = vpop.f32.mrb[0].mxu0
        %v451 = vadd.f32 %v383, %v450
        %v452 = vpop.f32.mrb[0].mxu0
        %453 = vmatprep.mubr.f32.mxu0 0.0
        %454 = vmatmul.mubr.f32.gmra.mrb[0].mxu0 %v362
        %v455 = vpop.f32.mrb[0].mxu0
        %v456 = vadd.f32 %v383, %v455
        %v457 = vpop.f32.mrb[0].mxu0
        %458 = vdwg.mxu0
        %v459 = vmax.f32 %v451, 0.0
        %v460 = vmax.f32 %v456, 0.0
        %v461 = vld [vmem:[#allocation2] sm:$0xff]
        %v462 = vld [vmem:[#allocation2 + $0x8] sm:$0xff]
        %v463 = vld [vmem:[#allocation2 + $0x10] sm:$0xff]
        %v464 = vld [vmem:[#allocation2 + $0x18] sm:$0xff]
        %v465 = vld [vmem:[#allocation2 + $0x20] sm:$0xff]
        %v466 = vld [vmem:[#allocation2 + $0x28] sm:$0xff]
        %v467 = vld [vmem:[#allocation2 + $0x30] sm:$0xff]
        %v468 = vld [vmem:[#allocation2 + $0x38] sm:$0xff]
        %v469 = vld [vmem:[#allocation2 + $0x40] sm:$0xff]
        %v470 = vld [vmem:[#allocation2 + $0x48] sm:$0xff]
        %v471 = vld [vmem:[#allocation2 + $0x50] sm:$0xff]
        %v472 = vld [vmem:[#allocation2 + $0x58] sm:$0xff]
        %v473 = vld [vmem:[#allocation2 + $0x60] sm:$0xff]
        %v474 = vld [vmem:[#allocation2 + $0x68] sm:$0xff]
        %v475 = vld [vmem:[#allocation2 + $0x70] sm:$0xff]
        %v476 = vld [vmem:[#allocation2 + $0x78] sm:$0xff]
        %v477 = vld [vmem:[%s5 + $0x2] sm:$0x1]
        %v478 = vlaneseq
        %v479 = vshrl.u32 %v478, 7
        %v480 = vsub.s32 0, %v479
        %v481 = vrot.slane %v477, %v480
        %482 = vmatprep.subr.mxu0 0.0
        %483 = vmatpush1.msra.mxu0 %v461
        %484 = vmatprep.subr.mxu0 0.0
        %485 = vmatpush1.msra.mxu0 %v462
        %486 = vmatprep.subr.mxu0 0.0
        %487 = vmatpush1.msra.mxu0 %v463
        %488 = vmatprep.subr.mxu0 0.0
        %489 = vmatpush1.msra.mxu0 %v464
        %490 = vmatprep.subr.mxu0 0.0
        %491 = vmatpush1.msra.mxu0 %v465
        %492 = vmatprep.subr.mxu0 0.0
        %493 = vmatpush1.msra.mxu0 %v466
        %494 = vmatprep.subr.mxu0 0.0
        %495 = vmatpush1.msra.mxu0 %v467
        %496 = vmatprep.subr.mxu0 0.0
        %497 = vmatpush1.msra.mxu0 %v468
        %498 = vmatprep.subr.mxu0 0.0
        %499 = vmatpush1.msra.mxu0 %v469
        %500 = vmatprep.subr.mxu0 0.0
        %501 = vmatpush1.msra.mxu0 %v470
        %502 = vmatprep.subr.mxu0 0.0
        %503 = vmatpush1.msra.mxu0 %v471
        %504 = vmatprep.subr.mxu0 0.0
        %505 = vmatpush1.msra.mxu0 %v472
        %506 = vmatprep.subr.mxu0 0.0
        %507 = vmatpush1.msra.mxu0 %v473
        %508 = vmatprep.subr.mxu0 0.0
        %509 = vmatpush1.msra.mxu0 %v474
        %510 = vmatprep.subr.mxu0 0.0
        %511 = vmatpush1.msra.mxu0 %v475
        %512 = vmatprep.subr.mxu0 0.0
        %513 = vmatpush1.msra.mxu0 %v476
        %514 = vmatprep.subr.mxu0 0.0
        %515 = vmatpush1.msra.mxu0 0.0
        %516 = vmatprep.subr.mxu0 0.0
        %517 = vmatpush1.msra.mxu0 0.0
        %518 = vmatprep.subr.mxu0 0.0
        %519 = vmatpush1.msra.mxu0 0.0
        %520 = vmatprep.subr.mxu0 0.0
        %521 = vmatpush1.msra.mxu0 0.0
        %522 = vmatprep.subr.mxu0 0.0
        %523 = vmatpush1.msra.mxu0 0.0
        %524 = vmatprep.subr.mxu0 0.0
        %525 = vmatpush1.msra.mxu0 0.0
        %526 = vmatprep.subr.mxu0 0.0
        %527 = vmatpush1.msra.mxu0 0.0
        %528 = vmatprep.subr.mxu0 0.0
        %529 = vmatpush1.msra.mxu0 0.0
        %530 = vmatprep.subr.mxu0 0.0
        %531 = vmatpush1.msra.mxu0 0.0
        %532 = vmatprep.subr.mxu0 0.0
        %533 = vmatpush1.msra.mxu0 0.0
        %534 = vmatprep.subr.mxu0 0.0
        %535 = vmatpush1.msra.mxu0 0.0
        %536 = vmatprep.subr.mxu0 0.0
        %537 = vmatpush1.msra.mxu0 0.0
        %538 = vmatprep.subr.mxu0 0.0
        %539 = vmatpush1.msra.mxu0 0.0
        %540 = vmatprep.subr.mxu0 0.0
        %541 = vmatpush1.msra.mxu0 0.0
        %542 = vmatprep.subr.mxu0 0.0
        %543 = vmatpush1.msra.mxu0 0.0
        %544 = vmatprep.subr.mxu0 0.0
        %545 = vmatpush1.msra.mxu0 0.0
        %546 = vmatprep.mubr.f32.mxu0 0.0
        %547 = vmatmul.mubr.f32.gmra.mrb[0].mxu0 %v459
        %v548 = vpop.f32.mrb[0].mxu0
        %v549 = vadd.f32 %v481, %v548
        %v550 = vpop.f32.mrb[0].mxu0
        %551 = vmatprep.mubr.f32.mxu0 0.0
        %552 = vmatmul.mubr.f32.gmra.mrb[0].mxu0 %v460
        %v553 = vpop.f32.mrb[0].mxu0
        %v554 = vadd.f32 %v481, %v553
        %v555 = vpop.f32.mrb[0].mxu0
        %556 = vdwg.mxu0
        %v557 = vmax.f32 %v549, 0.0
        %v558 = vmax.f32 %v554, 0.0
        %v559 = vld [vmem:[%s4] sm:$0xff]
        %v560 = vld [vmem:[%s4 + $0x8] sm:$0xff]
        %v561 = vld [vmem:[%s4 + $0x10] sm:$0xff]
        %v562 = vld [vmem:[%s4 + $0x18] sm:$0xff]
        %v563 = vld [vmem:[%s4 + $0x20] sm:$0xff]
        %v564 = vld [vmem:[%s4 + $0x28] sm:$0xff]
        %v565 = vld [vmem:[%s4 + $0x30] sm:$0xff]
        %v566 = vld [vmem:[%s4 + $0x38] sm:$0xff]
        %v567 = vld [vmem:[%s4 + $0x40] sm:$0xff]
        %v568 = vld [vmem:[%s4 + $0x48] sm:$0xff]
        %v569 = vld [vmem:[%s4 + $0x50] sm:$0xff]
        %v570 = vld [vmem:[%s4 + $0x58] sm:$0xff]
        %v571 = vld [vmem:[%s4 + $0x60] sm:$0xff]
        %v572 = vld [vmem:[%s4 + $0x68] sm:$0xff]
        %v573 = vld [vmem:[%s4 + $0x70] sm:$0xff]
        %v574 = vld [vmem:[%s4 + $0x78] sm:$0xff]
        %v575 = vld [vmem:[%s5 + $0x3] sm:$0x1]
        %v576 = vlaneseq
        %v577 = vshrl.u32 %v576, 7
        %v578 = vsub.s32 0, %v577
        %v579 = vrot.slane %v575, %v578
        %580 = vmatprep.subr.mxu0 0.0
        %581 = vmatpush1.msra.mxu0 %v559
        %582 = vmatprep.subr.mxu0 0.0
        %583 = vmatpush1.msra.mxu0 %v560
        %584 = vmatprep.subr.mxu0 0.0
        %585 = vmatpush1.msra.mxu0 %v561
        %586 = vmatprep.subr.mxu0 0.0
        %587 = vmatpush1.msra.mxu0 %v562
        %588 = vmatprep.subr.mxu0 0.0
        %589 = vmatpush1.msra.mxu0 %v563
        %590 = vmatprep.subr.mxu0 0.0
        %591 = vmatpush1.msra.mxu0 %v564
        %592 = vmatprep.subr.mxu0 0.0
        %593 = vmatpush1.msra.mxu0 %v565
        %594 = vmatprep.subr.mxu0 0.0
        %595 = vmatpush1.msra.mxu0 %v566
        %596 = vmatprep.subr.mxu0 0.0
        %597 = vmatpush1.msra.mxu0 %v567
        %598 = vmatprep.subr.mxu0 0.0
        %599 = vmatpush1.msra.mxu0 %v568
        %600 = vmatprep.subr.mxu0 0.0
        %601 = vmatpush1.msra.mxu0 %v569
        %602 = vmatprep.subr.mxu0 0.0
        %603 = vmatpush1.msra.mxu0 %v570
        %604 = vmatprep.subr.mxu0 0.0
        %605 = vmatpush1.msra.mxu0 %v571
        %606 = vmatprep.subr.mxu0 0.0
        %607 = vmatpush1.msra.mxu0 %v572
        %608 = vmatprep.subr.mxu0 0.0
        %609 = vmatpush1.msra.mxu0 %v573
        %610 = vmatprep.subr.mxu0 0.0
        %611 = vmatpush1.msra.mxu0 %v574
        %612 = vmatprep.subr.mxu0 0.0
        %613 = vmatpush1.msra.mxu0 0.0
        %614 = vmatprep.subr.mxu0 0.0
        %615 = vmatpush1.msra.mxu0 0.0
        %616 = vmatprep.subr.mxu0 0.0
        %617 = vmatpush1.msra.mxu0 0.0
        %618 = vmatprep.subr.mxu0 0.0
        %619 = vmatpush1.msra.mxu0 0.0
        %620 = vmatprep.subr.mxu0 0.0
        %621 = vmatpush1.msra.mxu0 0.0
        %622 = vmatprep.subr.mxu0 0.0
        %623 = vmatpush1.msra.mxu0 0.0
        %624 = vmatprep.subr.mxu0 0.0
        %625 = vmatpush1.msra.mxu0 0.0
        %626 = vmatprep.subr.mxu0 0.0
        %627 = vmatpush1.msra.mxu0 0.0
        %628 = vmatprep.subr.mxu0 0.0
        %629 = vmatpush1.msra.mxu0 0.0
        %630 = vmatprep.subr.mxu0 0.0
        %631 = vmatpush1.msra.mxu0 0.0
        %632 = vmatprep.subr.mxu0 0.0
        %633 = vmatpush1.msra.mxu0 0.0
        %634 = vmatprep.subr.mxu0 0.0
        %635 = vmatpush1.msra.mxu0 0.0
        %636 = vmatprep.subr.mxu0 0.0
        %637 = vmatpush1.msra.mxu0 0.0
        %638 = vmatprep.subr.mxu0 0.0
        %639 = vmatpush1.msra.mxu0 0.0
        %640 = vmatprep.subr.mxu0 0.0
        %641 = vmatpush1.msra.mxu0 0.0
        %642 = vmatprep.subr.mxu0 0.0
        %643 = vmatpush1.msra.mxu0 0.0
        %644 = vmatprep.mubr.f32.mxu0 0.0
        %645 = vmatmul.mubr.f32.gmra.mrb[0].mxu0 %v557
        %v646 = vpop.f32.mrb[0].mxu0
        %v647 = vadd.f32 %v579, %v646
        %v648 = vpop.f32.mrb[0].mxu0
        %649 = vmatprep.mubr.f32.mxu0 0.0
        %650 = vmatmul.mubr.f32.gmra.mrb[0].mxu0 %v558
        %v651 = vpop.f32.mrb[0].mxu0
        %v652 = vadd.f32 %v579, %v651
        %v653 = vpop.f32.mrb[0].mxu0
        %654 = vdwg.mxu0
        %vm655 = vcmask 7168
        %656 = vst.msk [vmem:[%s268] sm:$0xff] %vm655, %v647
        %657 = vst.msk [vmem:[%s268 + $0x8] sm:$0xff] %vm655, %v652
        %s658 = smul.u32 2, %s18
        %p659 = scmp.lt.s32.totalorder %s658, 3
        %s660 = scalar_select %p659, %s658, 3
        %s661 = smul.addr %s660, 8
        %s662 = scalar_lea.vmem %s6, %s661
        // Predicated region
        $region49: #{tpu_custom_call.1} parent=43 // pred_check
          %p663 = pneg %p167
        $region50: #{tpu_custom_call.1} parent=43 // pred_check_branch
          %665 = sbr.rel (%p663) target = $region52
        $region51: #{tpu_custom_call.1} parent=43 // pred_region
          %s666 = smul.u32 2, %s18
        $region52: #{tpu_custom_call.1} parent=43 // pred_fallthru
          _
      $region44: #{tpu_custom_call.1} parent=5 // pred_fallthru
        _
      %p667 = scmp.le.s32.totalorder 2, %s13
      // Predicated region
      $region53: #{tpu_custom_call.1} parent=5 // pred_check
        %p668 = pneg %p667
      $region54: #{tpu_custom_call.1} parent=5 // pred_check_branch
        %670 = sbr.rel (%p668) target = $region56
      $region55: #{tpu_custom_call.1} parent=5 // pred_region
        %s671 = ssub.s32 %s13, 2
        // Predicated region
        $region57: #{tpu_custom_call.1} parent=55 // pred_check
          %p672 = pneg %p173
        $region58: #{tpu_custom_call.1} parent=55 // pred_check_branch
          %674 = sbr.rel (%p672) target = $region60
        $region59: #{tpu_custom_call.1} parent=55 // pred_region
          %s675 = smul.u32 2, %s19
          %p676 = scmp.lt.s32.totalorder %s675, 3
          %s677 = scalar_select %p676, %s675, 3
          %s678 = smul.addr %s677, 8
          %s679 = scalar_lea.vmem %s6, %s678
        $region60: #{tpu_custom_call.1} parent=55 // pred_fallthru
          _
      $region56: #{tpu_custom_call.1} parent=5 // pred_fallthru
        _
    $region6: #{tpu_custom_call.1} parent=1 // loop_footer
      %s17 = sadd.s32 1, %s13
    $region7: #{tpu_custom_call.1} parent=1 // loop_footer_branch
      %12 = sbr.rel target = $region3
    $region8: #{tpu_custom_call.1} parent=1 // loop_exit
      _
    %680 = vsyncpa [#allocation3], 1
    %s681 = scalar_lea.sflag [#allocation3], 1
    %682 = vsyncpa %s681, 1

</llo_original>
